<compile_context>
chip_gen: v7x
topology: tpu7x:2x2x1
jax: 0.10.0
libtpu: 0.0.40
codegen_flags: <defaults>
</compile_context>

<pallas_src>
import functools
import math

import jax
import jax.numpy as jnp
from jax.experimental import pallas as pl
from jax.experimental.pallas import tpu as pltpu


def _round_up(x, m):
    return ((x + m - 1) // m) * m


def _pick_tm(n_batch, m_pad, cap=2048):
    """Largest 128-multiple divisor of m_pad that is <= cap and (when possible)
    leaves >= 4 grid steps so both v7x TensorCores get at least 2 steps each."""
    q = m_pad // 128
    cands = sorted(
        {128 * d for d in range(1, q + 1) if q % d == 0 and 128 * d <= cap},
        reverse=True,
    )
    if not cands:                       # m_pad larger than cap with no divisor <= cap
        cands = [128]
    for tm in cands:
        if n_batch * (m_pad // tm) >= 4:
            return tm
    return cands[0]                     # tiny problem: fewest steps wins


def _pick_vmem_limit():
    """~3/4 of physical VMEM: ~96 MiB on v5e/v6e (128 MiB), 48 MiB on v7x (64 MiB/TC)."""
    try:
        cap = pltpu.get_tpu_info().vmem_capacity_bytes
        return min((int(cap) * 3) // 4, 100 * 1024 * 1024)
    except Exception:
        return 48 * 1024 * 1024         # safe on every generation


def _fused_mlp_kernel(depth, compute_dtype, *refs):
    """All depth layers fused; activations stay in VMEM/vregs across layers.

    refs = (x_ref, w0_ref, b_ref[, wrest_ref], o_ref)
      x_ref:     (C_in, TM)             channel-major tile, pixels on lanes
      w0_ref:    (C_out, C_in)          layer-0 weight (native dtype)
      b_ref:     (depth, C_out, 1)      all biases, f32
      wrest_ref: (depth-1, C_out, C_out) layers 1..depth-1 weights (if depth > 1)
      o_ref:     (C_out, TM)
    """
    if depth > 1:
        x_ref, w0_ref, b_ref, wrest_ref, o_ref = refs
    else:
        x_ref, w0_ref, b_ref, o_ref = refs
        wrest_ref = None

    x = x_ref[...]                                        # native dtype -> fast MXU path
    for layer in range(depth):                            # static unroll over depth
        w = w0_ref[...] if layer == 0 else wrest_ref[layer - 1]
        b = b_ref[layer]                                  # (C_out, 1) f32
        y = jnp.dot(w, x, preferred_element_type=jnp.float32) + b
        y = jnp.maximum(y, 0.0)                           # ReLU in f32
        if layer + 1 < depth:
            x = y.astype(compute_dtype)                   # keep next matmul at native rate
        else:
            o_ref[...] = y.astype(o_ref.dtype)


def mlp_block_forward(x_nchw, params, *, tm=None):
    """x_nchw: (N, C_in, H, W) -> (N, C_out, H, W).
    params: [(W_l (Co, Ci), b_l (Co,)), ...] with Ci = C_in for l=0, else Co."""
    n, c_in, h, w = x_nchw.shape
    m = h * w
    depth = len(params)
    c_out = params[-1][0].shape[0]
    dtype = x_nchw.dtype
    itemsize = jnp.dtype(dtype).itemsize

    # Lane padding only to the next multiple of 128 (<= 127 wasted lanes).
    m_pad = _round_up(m, 128)
    if tm is None:
        tm = _pick_tm(n, m_pad)
    else:
        tm = _round_up(tm, 128)
        m_pad = _round_up(m, tm)

    # NCHW -> (N, C, H*W): free reshape (already channel-major), no transpose.
    x3 = x_nchw.reshape(n, c_in, m)
    if m_pad != m:
        # TODO(synk): handle the ragged tail in-kernel (masked tail store) to drop
        # this pad/slice pair of HBM copies entirely.
        x3 = jnp.pad(x3, ((0, 0), (0, 0), (0, m_pad - m)))

    # Stack params: layer-0 weight separate; layers 1.. share shape (Co, Co).
    w0 = params[0][0].astype(dtype)
    b_all = jnp.stack([b.reshape(c_out, 1).astype(jnp.float32) for (_, b) in params])
    operands = [x3, w0, b_all]
    in_specs = [
        pl.BlockSpec((pl.Squeezed(), c_in, tm), lambda b, i: (b, 0, i)),
        pl.BlockSpec((c_out, c_in), lambda b, i: (0, 0)),
        pl.BlockSpec((depth, c_out, 1), lambda b, i: (0, 0, 0)),
    ]
    if depth > 1:
        w_rest = jnp.stack([wgt.astype(dtype) for (wgt, _) in params[1:]])
        operands.append(w_rest)
        in_specs.append(pl.BlockSpec((depth - 1, c_out, c_out), lambda b, i: (0, 0, 0)))

    grid = (n, m_pad // tm)

    flops = 2 * n * m_pad * sum(wgt.shape[0] * wgt.shape[1] for (wgt, _) in params)
    bytes_accessed = (
        n * m_pad * (c_in + c_out) * itemsize
        + sum(int(wgt.size) for (wgt, _) in params) * itemsize
        + depth * c_out * 4
    )

    out3 = pl.pallas_call(
        functools.partial(_fused_mlp_kernel, depth, dtype),
        out_shape=jax.ShapeDtypeStruct((n, c_out, m_pad), dtype),
        grid_spec=pltpu.PrefetchScalarGridSpec(
            num_scalar_prefetch=0,
            grid=grid,
            in_specs=in_specs,
            out_specs=pl.BlockSpec((pl.Squeezed(), c_out, tm), lambda b, i: (b, 0, i)),
        ),
        compiler_params=pltpu.CompilerParams(
            dimension_semantics=("parallel", "parallel"),  # both v7x TCs get tiles
            vmem_limit_bytes=_pick_vmem_limit(),
        ),
        cost_estimate=pl.CostEstimate(
            flops=flops, transcendentals=0, bytes_accessed=bytes_accessed
        ),
    )(*operands)

    if m_pad != m:
        out3 = out3[:, :, :m]
    return out3.reshape(n, c_out, h, w)


def xavier_uniform_conv1x1(key, c_out, c_in, dtype=jnp.float32):
    # PyTorch Conv2d weight (out, in, 1, 1): fan_in = in, fan_out = out.
    bound = math.sqrt(6.0 / (c_in + c_out))
    # Stored directly in the (C_out, C_in) orientation the kernel consumes.
    return jax.random.uniform(
        key, (c_out, c_in), dtype=dtype, minval=-bound, maxval=bound
    )


def make_mlp_block_params(key, in_features, out_features, depth_of_mlp):
    params = []
    c_in = in_features
    for _ in range(depth_of_mlp):
        key, sub = jax.random.split(key)
        wgt = xavier_uniform_conv1x1(sub, out_features, c_in)
        bias = jnp.zeros((out_features,), jnp.float32)      # nn.init.zeros_
        params.append((wgt, bias))
        c_in = out_features
    return params


if __name__ == "__main__":
    key = jax.random.PRNGKey(0)
    k_x, k_p = jax.random.split(key)

    # Small shapes consistent with the module: batch=2, in=4, out=8, 16x16, depth=3.
    N, C_IN, C_OUT, H, W, DEPTH = 2, 4, 8, 16, 16, 3
    x = jax.random.normal(k_x, (N, C_IN, H, W), dtype=jnp.float32)
    params = make_mlp_block_params(k_p, C_IN, C_OUT, DEPTH)

    out = mlp_block_forward(x, params)
    out = jax.block_until_ready(out)

    # Pure-JAX reference (1x1 conv == channel matmul), not part of the hot path.
    ref = x
    for (wgt, bias) in params:
        ref = jnp.einsum("nchw,oc->nohw", ref, wgt) + bias[None, :, None, None]
        ref = jnp.maximum(ref, 0.0)
    assert out.shape == (N, C_OUT, H, W)
    assert jnp.allclose(out, ref, atol=1e-5, rtol=1e-5)

    print("KERNEL_OK")
</pallas_src>

<mosaic_0001>
module attributes {stable_mosaic.version = 11 : i64} {
  func.func @_fused_mlp_kernel(%arg0: i32, %arg1: i32, %arg2: memref<1x4x128xf32, #tpu.memory_space<vmem>>, %arg3: memref<8x4xf32, #tpu.memory_space<vmem>>, %arg4: memref<3x8x1xf32, #tpu.memory_space<vmem>>, %arg5: memref<2x8x8xf32, #tpu.memory_space<vmem>>, %arg6: memref<1x8x128xf32, #tpu.memory_space<vmem>>) attributes {dimension_semantics = [#tpu.dimension_semantics<parallel>, #tpu.dimension_semantics<parallel>], iteration_bounds = array<i64: 2, 2>, scalar_prefetch = 0 : i64, scratch_operands = 0 : i64, tpu.core_type = #tpu.core_type<tc>, window_params = [{transform_indices = @transform_0, window_bounds = array<i64: 1, 4, 128>}, {pipeline_mode = #tpu.pipeline_mode<synchronous>, transform_indices = @transform_1, window_bounds = array<i64: 8, 4>}, {pipeline_mode = #tpu.pipeline_mode<synchronous>, transform_indices = @transform_2, window_bounds = array<i64: 3, 8, 1>}, {pipeline_mode = #tpu.pipeline_mode<synchronous>, transform_indices = @transform_3, window_bounds = array<i64: 2, 8, 8>}, {transform_indices = @transform_4, window_bounds = array<i64: 1, 8, 128>}]} {
    %c0 = arith.constant 0 : index
    %c0_0 = arith.constant 0 : index
    %c0_1 = arith.constant 0 : index
    %0 = vector.load %arg2[%c0, %c0_0, %c0_1] : memref<1x4x128xf32, #tpu.memory_space<vmem>>, vector<1x4x128xf32>
    %1 = vector.shape_cast %0 : vector<1x4x128xf32> to vector<4x128xf32>
    %c0_2 = arith.constant 0 : index
    %c0_3 = arith.constant 0 : index
    %2 = vector.load %arg3[%c0_2, %c0_3] : memref<8x4xf32, #tpu.memory_space<vmem>>, vector<8x4xf32>
    %c0_4 = arith.constant 0 : index
    %c0_5 = arith.constant 0 : index
    %c0_6 = arith.constant 0 : index
    %3 = vector.load %arg4[%c0_4, %c0_5, %c0_6] : memref<3x8x1xf32, #tpu.memory_space<vmem>>, vector<1x8x1xf32>
    %4 = vector.shape_cast %3 : vector<1x8x1xf32> to vector<8x1xf32>
    %cst = arith.constant dense<0.000000e+00> : vector<8x128xf32>
    %5 = tpu.matmul %2, %1, %cst {dimension_numbers = #tpu.dot_dimension_numbers<[1], [0], [0], [1], [0, 0, 1, 1], [], []>} : vector<8x4xf32>, vector<4x128xf32>, vector<8x128xf32> -> vector<8x128xf32>
    %6 = vector.broadcast %4 : vector<8x1xf32> to vector<8x128xf32>
    %7 = arith.addf %5, %6 : vector<8x128xf32>
    %cst_7 = arith.constant 0.000000e+00 : f32
    %8 = vector.broadcast %cst_7 : f32 to vector<8x128xf32>
    %9 = arith.maximumf %7, %8 : vector<8x128xf32>
    %c0_8 = arith.constant 0 : index
    %c0_9 = arith.constant 0 : index
    %c0_10 = arith.constant 0 : index
    %10 = vector.load %arg5[%c0_8, %c0_9, %c0_10] : memref<2x8x8xf32, #tpu.memory_space<vmem>>, vector<1x8x8xf32>
    %11 = vector.shape_cast %10 : vector<1x8x8xf32> to vector<8x8xf32>
    %c1 = arith.constant 1 : index
    %c0_11 = arith.constant 0 : index
    %c0_12 = arith.constant 0 : index
    %12 = vector.load %arg4[%c1, %c0_11, %c0_12] : memref<3x8x1xf32, #tpu.memory_space<vmem>>, vector<1x8x1xf32>
    %13 = vector.shape_cast %12 : vector<1x8x1xf32> to vector<8x1xf32>
    %cst_13 = arith.constant dense<0.000000e+00> : vector<8x128xf32>
    %14 = tpu.matmul %11, %9, %cst_13 {dimension_numbers = #tpu.dot_dimension_numbers<[1], [0], [0], [1], [0, 0, 1, 1], [], []>} : vector<8x8xf32>, vector<8x128xf32>, vector<8x128xf32> -> vector<8x128xf32>
    %15 = vector.broadcast %13 : vector<8x1xf32> to vector<8x128xf32>
    %16 = arith.addf %14, %15 : vector<8x128xf32>
    %cst_14 = arith.constant 0.000000e+00 : f32
    %17 = vector.broadcast %cst_14 : f32 to vector<8x128xf32>
    %18 = arith.maximumf %16, %17 : vector<8x128xf32>
    %c1_15 = arith.constant 1 : index
    %c0_16 = arith.constant 0 : index
    %c0_17 = arith.constant 0 : index
    %19 = vector.load %arg5[%c1_15, %c0_16, %c0_17] : memref<2x8x8xf32, #tpu.memory_space<vmem>>, vector<1x8x8xf32>
    %20 = vector.shape_cast %19 : vector<1x8x8xf32> to vector<8x8xf32>
    %c2 = arith.constant 2 : index
    %c0_18 = arith.constant 0 : index
    %c0_19 = arith.constant 0 : index
    %21 = vector.load %arg4[%c2, %c0_18, %c0_19] : memref<3x8x1xf32, #tpu.memory_space<vmem>>, vector<1x8x1xf32>
    %22 = vector.shape_cast %21 : vector<1x8x1xf32> to vector<8x1xf32>
    %cst_20 = arith.constant dense<0.000000e+00> : vector<8x128xf32>
    %23 = tpu.matmul %20, %18, %cst_20 {dimension_numbers = #tpu.dot_dimension_numbers<[1], [0], [0], [1], [0, 0, 1, 1], [], []>} : vector<8x8xf32>, vector<8x128xf32>, vector<8x128xf32> -> vector<8x128xf32>
    %24 = vector.broadcast %22 : vector<8x1xf32> to vector<8x128xf32>
    %25 = arith.addf %23, %24 : vector<8x128xf32>
    %cst_21 = arith.constant 0.000000e+00 : f32
    %26 = vector.broadcast %cst_21 : f32 to vector<8x128xf32>
    %27 = arith.maximumf %25, %26 : vector<8x128xf32>
    %c0_22 = arith.constant 0 : index
    %c0_23 = arith.constant 0 : index
    %c0_24 = arith.constant 0 : index
    %28 = vector.load %arg6[%c0_22, %c0_23, %c0_24] : memref<1x8x128xf32, #tpu.memory_space<vmem>>, vector<1x8x128xf32>
    %29 = vector.shape_cast %28 : vector<1x8x128xf32> to vector<8x128xf32>
    %30 = vector.shape_cast %27 : vector<8x128xf32> to vector<1x8x128xf32>
    tpu.vector_store %arg6[%c0_22, %c0_23, %c0_24], %30 {strides = array<i32>} : memref<1x8x128xf32, #tpu.memory_space<vmem>>, vector<1x8x128xf32>,
    return
  }
  func.func @transform_0(%arg0: i32, %arg1: i32) -> (i32, i32, i32) {
    %c0_i32 = arith.constant 0 : i32
    %c0_i32_0 = arith.constant 0 : i32
    return %arg0, %c0_i32, %arg1 : i32, i32, i32
  }
  func.func @transform_1(%arg0: i32, %arg1: i32) -> (i32, i32) {
    %c0_i32 = arith.constant 0 : i32
    %c0_i32_0 = arith.constant 0 : i32
    %c0_i32_1 = arith.constant 0 : i32
    return %c0_i32, %c0_i32_0 : i32, i32
  }
  func.func @transform_2(%arg0: i32, %arg1: i32) -> (i32, i32, i32) {
    %c0_i32 = arith.constant 0 : i32
    %c0_i32_0 = arith.constant 0 : i32
    %c0_i32_1 = arith.constant 0 : i32
    %c0_i32_2 = arith.constant 0 : i32
    return %c0_i32, %c0_i32_0, %c0_i32_1 : i32, i32, i32
  }
  func.func @transform_3(%arg0: i32, %arg1: i32) -> (i32, i32, i32) {
    %c0_i32 = arith.constant 0 : i32
    %c0_i32_0 = arith.constant 0 : i32
    %c0_i32_1 = arith.constant 0 : i32
    %c0_i32_2 = arith.constant 0 : i32
    return %c0_i32, %c0_i32_0, %c0_i32_1 : i32, i32, i32
  }
  func.func @transform_4(%arg0: i32, %arg1: i32) -> (i32, i32, i32) {
    %c0_i32 = arith.constant 0 : i32
    %c0_i32_0 = arith.constant 0 : i32
    return %arg0, %c0_i32, %arg1 : i32, i32, i32
  }
}

</mosaic_0001>

<llo_original>
// kernel: tpu_custom_call.1
$region0: #{tpu_custom_call.1}
  #allocation0 [shape = 'u32[]', space=smem, size = 0x4, offset = 0x4, fixed_abs, tag = 'smem constant byte address 0x4 - core index']
  #allocation1 [shape = 'u32[144,128]{1,0:T(1,128)}', space=vmem, size = 0x12000, scoped, tag = 'internal scratch']
  %s0 = inlined_call_operand.vmem [shape: f32[2,4,256], index: 0, kind: input, shape index: {}]
  %s1 = inlined_call_operand.vmem [shape: f32[8,4], index: 1, kind: input, shape index: {}]
  %s2 = inlined_call_operand.vmem [shape: f32[3,8,1], index: 2, kind: input, shape index: {}]
  %s3 = inlined_call_operand.vmem [shape: f32[2,8,8], index: 3, kind: input, shape index: {}]
  %s4 = inlined_call_operand.hbm [shape: f32[2,8,256], index: 4, kind: output, shape index: {}]
  %s5 = sld [smem:[#allocation0]]
  $region49: #{tpu_custom_call.1} parent=0
    _
  %s7 = ssub.s32 1, %s5
  %s8 = scalar_select 0, %s7, %s5
  $region1: #{tpu_custom_call.1} parent=0
    #allocation2 [shape = 'u8[8192]{0}', space=vmem, size = 0x2000, scoped, tag = 'output window, operand 0']
    #allocation3 [shape = 's32[2]{0}', space=sflag, size = 0x8, scoped, tag = 'scoped memory for tpu_custom_call.1']
    %9 = vsyncpa [#allocation3], 0
    %s10 = scalar_lea.sflag [#allocation3], 1
    %11 = vsyncpa %s10, 0
    loop: start=0, step=1, limit=6
    $region2: #{tpu_custom_call.1} parent=1 // loop_pre_header
      _
    $region3: #{tpu_custom_call.1} parent=1 // loop_header
      %s13 = sphi 0, %s17
      %p14 = scmp.ge.s32.totalorder %s13, 6
      %s20 = sphi 0, %s32
      %s21 = sphi 0, %s28
      %s22 = sphi 0, %s20
      %s23 = sphi 0, %s21
      %s24 = sphi 0, %s22
      %s25 = sphi 0, %s23
      %s37 = sphi 0, %s39
      %s40 = sphi 0, %s37
      %s41 = sphi 0, %s40
      %s57 = sphi 0, %s41
      %s61 = sphi 0, %s61
      %s63 = sphi 0, %s61
      %s64 = sphi 0, %s63
      %s78 = sphi 0, %s64
      %s82 = sphi 0, %s82
      %s84 = sphi 0, %s82
      %s85 = sphi 0, %s84
      %s99 = sphi 0, %s85
      %s103 = sphi 0, %s103
      %s105 = sphi 0, %s103
      %s106 = sphi 0, %s105
      %s120 = sphi 0, %s106
      %s128 = sphi 0, %s130
      %s131 = sphi 0, %s128
      %s132 = sphi 0, %s131
      %s148 = sphi 0, %s132
    $region4: #{tpu_custom_call.1} parent=1 // loop_header_branch
      %16 = sbr.rel (%p14) target = $region8
    $region5: #{tpu_custom_call.1} parent=1 // loop_body
      %s18 = ssub.s32 %s13, 1
      %s19 = ssub.s32 %s13, 2
      %s26 = sadd.s32 1, %s21
      %p27 = scmp.ge.s32.totalorder %s26, 2
      %s28 = scalar_select %p27, 0, %s26
      %s29 = sadd.s32 1, %s20
      %s30 = scalar_select %p27, %s29, %s20
      %p31 = scmp.ge.s32.totalorder %s30, 2
      %s32 = scalar_select %p31, 0, %s30
      %s33 = ssub.s32 %s20, %s32
      %s34 = ssub.s32 %s21, %s28
      %s35 = sor.u32 %s33, %s34
      %p36 = scmp.eq.s32.totalorder %s35, 0
      %s38 = sadd.s32 %s37, 1
      %s39 = scalar_select %p36, %s37, %s38
      %p42 = pneg %p36
      %p43 = scmp.eq.s32.totalorder %s13, 3
      %p44 = por %p42, %p43
      %p45 = scmp.ne.s32.totalorder %s37, %s40
      %p46 = scmp.eq.s32.totalorder %s13, 0
      %p47 = por %p45, %p46
      %p48 = scmp.ne.s32.totalorder %s37, %s40
      %p49 = scmp.eq.s32.totalorder %s18, 3
      %p50 = por %p48, %p49
      %p51 = scmp.ne.s32.totalorder %s40, %s41
      %p52 = scmp.eq.s32.totalorder %s18, 0
      %p53 = por %p51, %p52
      %p54 = scmp.ne.s32.totalorder %s40, %s41
      %p55 = scmp.eq.s32.totalorder %s19, 3
      %p56 = por %p54, %p55
      %p58 = scmp.ne.s32.totalorder %s41, %s57
      %p59 = scmp.eq.s32.totalorder %s19, 0
      %p60 = por %p58, %p59
      %s62 = sadd.s32 %s61, 1
      %p65 = scmp.eq.s32.totalorder %s13, 3
      %p66 = scmp.ne.s32.totalorder %s61, %s63
      %p67 = scmp.eq.s32.totalorder %s13, 0
      %p68 = por %p66, %p67
      %p69 = scmp.ne.s32.totalorder %s61, %s63
      %p70 = scmp.eq.s32.totalorder %s18, 3
      %p71 = por %p69, %p70
      %p72 = scmp.ne.s32.totalorder %s63, %s64
      %p73 = scmp.eq.s32.totalorder %s18, 0
      %p74 = por %p72, %p73
      %p75 = scmp.ne.s32.totalorder %s63, %s64
      %p76 = scmp.eq.s32.totalorder %s19, 3
      %p77 = por %p75, %p76
      %p79 = scmp.ne.s32.totalorder %s64, %s78
      %p80 = scmp.eq.s32.totalorder %s19, 0
      %p81 = por %p79, %p80
      %s83 = sadd.s32 %s82, 1
      %p86 = scmp.eq.s32.totalorder %s13, 3
      %p87 = scmp.ne.s32.totalorder %s82, %s84
      %p88 = scmp.eq.s32.totalorder %s13, 0
      %p89 = por %p87, %p88
      %p90 = scmp.ne.s32.totalorder %s82, %s84
      %p91 = scmp.eq.s32.totalorder %s18, 3
      %p92 = por %p90, %p91
      %p93 = scmp.ne.s32.totalorder %s84, %s85
      %p94 = scmp.eq.s32.totalorder %s18, 0
      %p95 = por %p93, %p94
      %p96 = scmp.ne.s32.totalorder %s84, %s85
      %p97 = scmp.eq.s32.totalorder %s19, 3
      %p98 = por %p96, %p97
      %p100 = scmp.ne.s32.totalorder %s85, %s99
      %p101 = scmp.eq.s32.totalorder %s19, 0
      %p102 = por %p100, %p101
      %s104 = sadd.s32 %s103, 1
      %p107 = scmp.eq.s32.totalorder %s13, 3
      %p108 = scmp.ne.s32.totalorder %s103, %s105
      %p109 = scmp.eq.s32.totalorder %s13, 0
      %p110 = por %p108, %p109
      %p111 = scmp.ne.s32.totalorder %s103, %s105
      %p112 = scmp.eq.s32.totalorder %s18, 3
      %p113 = por %p111, %p112
      %p114 = scmp.ne.s32.totalorder %s105, %s106
      %p115 = scmp.eq.s32.totalorder %s18, 0
      %p116 = por %p114, %p115
      %p117 = scmp.ne.s32.totalorder %s105, %s106
      %p118 = scmp.eq.s32.totalorder %s19, 3
      %p119 = por %p117, %p118
      %p121 = scmp.ne.s32.totalorder %s106, %s120
      %p122 = scmp.eq.s32.totalorder %s19, 0
      %p123 = por %p121, %p122
      %s124 = ssub.s32 %s20, %s32
      %s125 = ssub.s32 %s21, %s28
      %s126 = sor.u32 %s124, %s125
      %p127 = scmp.eq.s32.totalorder %s126, 0
      %s129 = sadd.s32 %s128, 1
      %s130 = scalar_select %p127, %s128, %s129
      %p133 = pneg %p127
      %p134 = scmp.eq.s32.totalorder %s13, 3
      %p135 = por %p133, %p134
      %p136 = scmp.ne.s32.totalorder %s128, %s131
      %p137 = scmp.eq.s32.totalorder %s13, 0
      %p138 = por %p136, %p137
      %p139 = scmp.ne.s32.totalorder %s128, %s131
      %p140 = scmp.eq.s32.totalorder %s18, 3
      %p141 = por %p139, %p140
      %p142 = scmp.ne.s32.totalorder %s131, %s132
      %p143 = scmp.eq.s32.totalorder %s18, 0
      %p144 = por %p142, %p143
      %p145 = scmp.ne.s32.totalorder %s131, %s132
      %p146 = scmp.eq.s32.totalorder %s19, 3
      %p147 = por %p145, %p146
      %p149 = scmp.ne.s32.totalorder %s132, %s148
      %p150 = scmp.eq.s32.totalorder %s19, 0
      %p151 = por %p149, %p150
      %p152 = scmp.le.s32.totalorder 1, %s13
      %p153 = scmp.lt.s32.totalorder %s13, 5
      %p154 = pnand %p152, %p153
      %p155 = pneg %p154
      // Predicated region
      $region9: #{tpu_custom_call.1} parent=5 // pred_check
        _
      $region10: #{tpu_custom_call.1} parent=5 // pred_check_branch
        %157 = sbr.rel (%p154) target = $region12
      $region11: #{tpu_custom_call.1} parent=5 // pred_region
        %s158 = ssub.s32 %s13, 1
        // Predicated region
        $region13: #{tpu_custom_call.1} parent=11 // pred_check
          %p159 = pneg %p74
        $region14: #{tpu_custom_call.1} parent=11 // pred_check_branch
          %161 = sbr.rel (%p159) target = $region16
        $region15: #{tpu_custom_call.1} parent=11 // pred_region
          _
        $region16: #{tpu_custom_call.1} parent=11 // pred_fallthru
          _
        // Predicated region
        $region17: #{tpu_custom_call.1} parent=11 // pred_check
          %p162 = pneg %p95
        $region18: #{tpu_custom_call.1} parent=11 // pred_check_branch
          %164 = sbr.rel (%p162) target = $region20
        $region19: #{tpu_custom_call.1} parent=11 // pred_region
          _
        $region20: #{tpu_custom_call.1} parent=11 // pred_fallthru
          _
        // Predicated region
        $region21: #{tpu_custom_call.1} parent=11 // pred_check
          %p165 = pneg %p116
        $region22: #{tpu_custom_call.1} parent=11 // pred_check_branch
          %167 = sbr.rel (%p165) target = $region24
        $region23: #{tpu_custom_call.1} parent=11 // pred_region
          _
        $region24: #{tpu_custom_call.1} parent=11 // pred_fallthru
          _
      $region12: #{tpu_custom_call.1} parent=5 // pred_fallthru
        _
      %p168 = scmp.lt.s32.totalorder %s13, 4
      // Predicated region
      $region25: #{tpu_custom_call.1} parent=5 // pred_check
        %p169 = pneg %p168
      $region26: #{tpu_custom_call.1} parent=5 // pred_check_branch
        %171 = sbr.rel (%p169) target = $region28
      $region27: #{tpu_custom_call.1} parent=5 // pred_region
        // Predicated region
        $region29: #{tpu_custom_call.1} parent=27 // pred_check
          %p172 = pneg %p47
        $region30: #{tpu_custom_call.1} parent=27 // pred_check_branch
          %174 = sbr.rel (%p172) target = $region32
        $region31: #{tpu_custom_call.1} parent=27 // pred_region
          %p175 = scmp.lt.s32.totalorder %s20, 1
          %s176 = scalar_select %p175, %s20, 1
          %p177 = scmp.lt.s32.totalorder %s21, 1
          %s178 = scalar_select %p177, %s21, 1
          %s179 = smul.addr %s176, 2
          %s180 = sadd.s32 %s178, %s179
          %s181 = smul.addr %s180, 4
          %s182 = scalar_lea.vmem %s0, %s181
        $region32: #{tpu_custom_call.1} parent=27 // pred_fallthru
          _
      $region28: #{tpu_custom_call.1} parent=5 // pred_fallthru
        _
      %p183 = scmp.le.s32.totalorder 1, %s13
      %p184 = scmp.lt.s32.totalorder %s13, 5
      %p185 = pnand %p183, %p184
      %p186 = pneg %p185
      // Predicated region
      $region33: #{tpu_custom_call.1} parent=5 // pred_check
        _
      $region34: #{tpu_custom_call.1} parent=5 // pred_check_branch
        %188 = sbr.rel (%p185) target = $region36
      $region35: #{tpu_custom_call.1} parent=5 // pred_region
        %s189 = ssub.s32 %s13, 1
        %p190 = scmp.lt.s32.totalorder %s22, 1
        %s191 = scalar_select %p190, %s22, 1
        %p192 = scmp.lt.s32.totalorder %s23, 1
        %s193 = scalar_select %p192, %s23, 1
        %s194 = smul.addr %s191, 2
        %s195 = sadd.s32 %s193, %s194
        %s196 = smul.addr %s195, 4
        %s197 = scalar_lea.vmem %s0, %s196
        %p198 = pneg %p53
        %p199 = pneg %p50
        %p200 = pneg %p74
        %p201 = pneg %p71
        %p202 = pneg %p95
        %p203 = pneg %p92
        %p204 = pneg %p116
        %p205 = pneg %p113
        %p206 = pneg %p144
        %p207 = pneg %p141
        %s208 = sand.u32 %s131, 1
        %s209 = scalar_lea.sflag [#allocation3], %s208
        %s210 = sand.u32 %s131, 1
        %s211 = smul.addr %s210, 8
        %s212 = scalar_lea.vmem [#allocation2], %s211
        %p213 = scmp.lt.s32.totalorder %s22, 1
        %s214 = scalar_select %p213, %s22, 1
        %p215 = scmp.lt.s32.totalorder %s23, 1
        %s216 = scalar_select %p215, %s23, 1
        %s217 = smul.addr %s214, 2
        %s218 = sadd.s32 %s216, %s217
        %s219 = smul.addr %s218, 4
        %s220 = scalar_lea.vmem %s0, %s219
        %v221 = vld [vmem:[%s220] sm:$0xf]
        %v222 = vld [vmem:[%s1] sm:$0xff]
        %v223 = vld [vmem:[%s2] sm:$0xff]
        %225 = vset.pattern.permute.xlu0 0
        %226 = vperm.xlu0 %225, %v223
        %v227 = vpop.permute.xlu0 %226
        %vm229 = vcmask 31744
        %v231 = vsel %vm229, %v222, 0
        %vm233 = vcmask 1043456
        %v235 = vsel %vm233, %v221, 0
        %237 = vmatprep.subr.mxu0 0.0
        %238 = vmatpush1.msra.mxu0 %v235
        %239 = vmatprep.subr.mxu0 0.0
        %240 = vmatpush1.msra.mxu0 0.0
        %241 = vmatprep.subr.mxu0 0.0
        %242 = vmatpush1.msra.mxu0 0.0
        %243 = vmatprep.subr.mxu0 0.0
        %244 = vmatpush1.msra.mxu0 0.0
        %245 = vmatprep.subr.mxu0 0.0
        %246 = vmatpush1.msra.mxu0 0.0
        %247 = vmatprep.subr.mxu0 0.0
        %248 = vmatpush1.msra.mxu0 0.0
        %249 = vmatprep.subr.mxu0 0.0
        %250 = vmatpush1.msra.mxu0 0.0
        %251 = vmatprep.subr.mxu0 0.0
        %252 = vmatpush1.msra.mxu0 0.0
        %253 = vmatprep.subr.mxu0 0.0
        %254 = vmatpush1.msra.mxu0 0.0
        %255 = vmatprep.subr.mxu0 0.0
        %256 = vmatpush1.msra.mxu0 0.0
        %257 = vmatprep.subr.mxu0 0.0
        %258 = vmatpush1.msra.mxu0 0.0
        %259 = vmatprep.subr.mxu0 0.0
        %260 = vmatpush1.msra.mxu0 0.0
        %261 = vmatprep.subr.mxu0 0.0
        %262 = vmatpush1.msra.mxu0 0.0
        %263 = vmatprep.subr.mxu0 0.0
        %264 = vmatpush1.msra.mxu0 0.0
        %265 = vmatprep.subr.mxu0 0.0
        %266 = vmatpush1.msra.mxu0 0.0
        %267 = vmatprep.subr.mxu0 0.0
        %268 = vmatpush1.msra.mxu0 0.0
        %269 = vmatprep.subr.mxu0 0.0
        %270 = vmatpush1.msra.mxu0 0.0
        %271 = vmatprep.subr.mxu0 0.0
        %272 = vmatpush1.msra.mxu0 0.0
        %273 = vmatprep.subr.mxu0 0.0
        %274 = vmatpush1.msra.mxu0 0.0
        %275 = vmatprep.subr.mxu0 0.0
        %276 = vmatpush1.msra.mxu0 0.0
        %277 = vmatprep.subr.mxu0 0.0
        %278 = vmatpush1.msra.mxu0 0.0
        %279 = vmatprep.subr.mxu0 0.0
        %280 = vmatpush1.msra.mxu0 0.0
        %281 = vmatprep.subr.mxu0 0.0
        %282 = vmatpush1.msra.mxu0 0.0
        %283 = vmatprep.subr.mxu0 0.0
        %284 = vmatpush1.msra.mxu0 0.0
        %285 = vmatprep.subr.mxu0 0.0
        %286 = vmatpush1.msra.mxu0 0.0
        %287 = vmatprep.subr.mxu0 0.0
        %288 = vmatpush1.msra.mxu0 0.0
        %289 = vmatprep.subr.mxu0 0.0
        %290 = vmatpush1.msra.mxu0 0.0
        %291 = vmatprep.subr.mxu0 0.0
        %292 = vmatpush1.msra.mxu0 0.0
        %293 = vmatprep.subr.mxu0 0.0
        %294 = vmatpush1.msra.mxu0 0.0
        %295 = vmatprep.subr.mxu0 0.0
        %296 = vmatpush1.msra.mxu0 0.0
        %297 = vmatprep.subr.mxu0 0.0
        %298 = vmatpush1.msra.mxu0 0.0
        %299 = vmatprep.subr.mxu0 0.0
        %300 = vmatpush1.msra.mxu0 0.0
        %301 = vmatprep.mubr.f32.mxu0 0.0
        %302 = vmatmul.mubr.f32.gmra.mrb[0].mxu0 %v231
        %v303 = vpop.f32.mrb[0].mxu0
        %v304 = vadd.f32 %v227, %v303
        %v305 = vpop.f32.mrb[0].mxu0
        %306 = vdwg.mxu0
        %v307 = vmax.f32 %v304, 0.0
        %v308 = vld [vmem:[%s3] sm:$0xff]
        %s309 = scalar_lea.vmem %s2, 8
        %v310 = vld [vmem:[%s309] sm:$0xff]
        %312 = vset.pattern.permute.xlu0 0
        %313 = vperm.xlu0 %312, %v310
        %v314 = vpop.permute.xlu0 %313
        %vm316 = vcmask 64512
        %v318 = vsel %vm316, %v308, 0
        %320 = vmatprep.subr.mxu0 0.0
        %321 = vmatpush1.msra.mxu0 %v307
        %322 = vmatprep.subr.mxu0 0.0
        %323 = vmatpush1.msra.mxu0 0.0
        %324 = vmatprep.subr.mxu0 0.0
        %325 = vmatpush1.msra.mxu0 0.0
        %326 = vmatprep.subr.mxu0 0.0
        %327 = vmatpush1.msra.mxu0 0.0
        %328 = vmatprep.subr.mxu0 0.0
        %329 = vmatpush1.msra.mxu0 0.0
        %330 = vmatprep.subr.mxu0 0.0
        %331 = vmatpush1.msra.mxu0 0.0
        %332 = vmatprep.subr.mxu0 0.0
        %333 = vmatpush1.msra.mxu0 0.0
        %334 = vmatprep.subr.mxu0 0.0
        %335 = vmatpush1.msra.mxu0 0.0
        %336 = vmatprep.subr.mxu0 0.0
        %337 = vmatpush1.msra.mxu0 0.0
        %338 = vmatprep.subr.mxu0 0.0
        %339 = vmatpush1.msra.mxu0 0.0
        %340 = vmatprep.subr.mxu0 0.0
        %341 = vmatpush1.msra.mxu0 0.0
        %342 = vmatprep.subr.mxu0 0.0
        %343 = vmatpush1.msra.mxu0 0.0
        %344 = vmatprep.subr.mxu0 0.0
        %345 = vmatpush1.msra.mxu0 0.0
        %346 = vmatprep.subr.mxu0 0.0
        %347 = vmatpush1.msra.mxu0 0.0
        %348 = vmatprep.subr.mxu0 0.0
        %349 = vmatpush1.msra.mxu0 0.0
        %350 = vmatprep.subr.mxu0 0.0
        %351 = vmatpush1.msra.mxu0 0.0
        %352 = vmatprep.subr.mxu0 0.0
        %353 = vmatpush1.msra.mxu0 0.0
        %354 = vmatprep.subr.mxu0 0.0
        %355 = vmatpush1.msra.mxu0 0.0
        %356 = vmatprep.subr.mxu0 0.0
        %357 = vmatpush1.msra.mxu0 0.0
        %358 = vmatprep.subr.mxu0 0.0
        %359 = vmatpush1.msra.mxu0 0.0
        %360 = vmatprep.subr.mxu0 0.0
        %361 = vmatpush1.msra.mxu0 0.0
        %362 = vmatprep.subr.mxu0 0.0
        %363 = vmatpush1.msra.mxu0 0.0
        %364 = vmatprep.subr.mxu0 0.0
        %365 = vmatpush1.msra.mxu0 0.0
        %366 = vmatprep.subr.mxu0 0.0
        %367 = vmatpush1.msra.mxu0 0.0
        %368 = vmatprep.subr.mxu0 0.0
        %369 = vmatpush1.msra.mxu0 0.0
        %370 = vmatprep.subr.mxu0 0.0
        %371 = vmatpush1.msra.mxu0 0.0
        %372 = vmatprep.subr.mxu0 0.0
        %373 = vmatpush1.msra.mxu0 0.0
        %374 = vmatprep.subr.mxu0 0.0
        %375 = vmatpush1.msra.mxu0 0.0
        %376 = vmatprep.subr.mxu0 0.0
        %377 = vmatpush1.msra.mxu0 0.0
        %378 = vmatprep.subr.mxu0 0.0
        %379 = vmatpush1.msra.mxu0 0.0
        %380 = vmatprep.subr.mxu0 0.0
        %381 = vmatpush1.msra.mxu0 0.0
        %382 = vmatprep.subr.mxu0 0.0
        %383 = vmatpush1.msra.mxu0 0.0
        %384 = vmatprep.mubr.f32.mxu0 0.0
        %385 = vmatmul.mubr.f32.gmra.mrb[0].mxu0 %v318
        %v386 = vpop.f32.mrb[0].mxu0
        %v387 = vadd.f32 %v314, %v386
        %v388 = vpop.f32.mrb[0].mxu0
        %389 = vdwg.mxu0
        %v390 = vmax.f32 %v387, 0.0
        %s391 = scalar_lea.vmem %s3, 8
        %v392 = vld [vmem:[%s391] sm:$0xff]
        %s393 = scalar_lea.vmem %s2, 16
        %v394 = vld [vmem:[%s393] sm:$0xff]
        %396 = vset.pattern.permute.xlu0 0
        %397 = vperm.xlu0 %396, %v394
        %v398 = vpop.permute.xlu0 %397
        %v401 = vsel %vm316, %v392, 0
        %403 = vmatprep.subr.mxu0 0.0
        %404 = vmatpush1.msra.mxu0 %v390
        %405 = vmatprep.subr.mxu0 0.0
        %406 = vmatpush1.msra.mxu0 0.0
        %407 = vmatprep.subr.mxu0 0.0
        %408 = vmatpush1.msra.mxu0 0.0
        %409 = vmatprep.subr.mxu0 0.0
        %410 = vmatpush1.msra.mxu0 0.0
        %411 = vmatprep.subr.mxu0 0.0
        %412 = vmatpush1.msra.mxu0 0.0
        %413 = vmatprep.subr.mxu0 0.0
        %414 = vmatpush1.msra.mxu0 0.0
        %415 = vmatprep.subr.mxu0 0.0
        %416 = vmatpush1.msra.mxu0 0.0
        %417 = vmatprep.subr.mxu0 0.0
        %418 = vmatpush1.msra.mxu0 0.0
        %419 = vmatprep.subr.mxu0 0.0
        %420 = vmatpush1.msra.mxu0 0.0
        %421 = vmatprep.subr.mxu0 0.0
        %422 = vmatpush1.msra.mxu0 0.0
        %423 = vmatprep.subr.mxu0 0.0
        %424 = vmatpush1.msra.mxu0 0.0
        %425 = vmatprep.subr.mxu0 0.0
        %426 = vmatpush1.msra.mxu0 0.0
        %427 = vmatprep.subr.mxu0 0.0
        %428 = vmatpush1.msra.mxu0 0.0
        %429 = vmatprep.subr.mxu0 0.0
        %430 = vmatpush1.msra.mxu0 0.0
        %431 = vmatprep.subr.mxu0 0.0
        %432 = vmatpush1.msra.mxu0 0.0
        %433 = vmatprep.subr.mxu0 0.0
        %434 = vmatpush1.msra.mxu0 0.0
        %435 = vmatprep.subr.mxu0 0.0
        %436 = vmatpush1.msra.mxu0 0.0
        %437 = vmatprep.subr.mxu0 0.0
        %438 = vmatpush1.msra.mxu0 0.0
        %439 = vmatprep.subr.mxu0 0.0
        %440 = vmatpush1.msra.mxu0 0.0
        %441 = vmatprep.subr.mxu0 0.0
        %442 = vmatpush1.msra.mxu0 0.0
        %443 = vmatprep.subr.mxu0 0.0
        %444 = vmatpush1.msra.mxu0 0.0
        %445 = vmatprep.subr.mxu0 0.0
        %446 = vmatpush1.msra.mxu0 0.0
        %447 = vmatprep.subr.mxu0 0.0
        %448 = vmatpush1.msra.mxu0 0.0
        %449 = vmatprep.subr.mxu0 0.0
        %450 = vmatpush1.msra.mxu0 0.0
        %451 = vmatprep.subr.mxu0 0.0
        %452 = vmatpush1.msra.mxu0 0.0
        %453 = vmatprep.subr.mxu0 0.0
        %454 = vmatpush1.msra.mxu0 0.0
        %455 = vmatprep.subr.mxu0 0.0
        %456 = vmatpush1.msra.mxu0 0.0
        %457 = vmatprep.subr.mxu0 0.0
        %458 = vmatpush1.msra.mxu0 0.0
        %459 = vmatprep.subr.mxu0 0.0
        %460 = vmatpush1.msra.mxu0 0.0
        %461 = vmatprep.subr.mxu0 0.0
        %462 = vmatpush1.msra.mxu0 0.0
        %463 = vmatprep.subr.mxu0 0.0
        %464 = vmatpush1.msra.mxu0 0.0
        %465 = vmatprep.subr.mxu0 0.0
        %466 = vmatpush1.msra.mxu0 0.0
        %467 = vmatprep.mubr.f32.mxu0 0.0
        %468 = vmatmul.mubr.f32.gmra.mrb[0].mxu0 %v401
        %v469 = vpop.f32.mrb[0].mxu0
        %v470 = vadd.f32 %v398, %v469
        %v471 = vpop.f32.mrb[0].mxu0
        %472 = vdwg.mxu0
        %v473 = vmax.f32 %v470, 0.0
        %474 = vst [vmem:[%s212] sm:$0xff] %v473
        %s475 = sand.u32 %s131, 1
        %s476 = scalar_lea.sflag [#allocation3], %s475
        %s477 = sand.u32 %s131, 1
        %s478 = smul.addr %s477, 8
        %s479 = scalar_lea.vmem [#allocation2], %s478
        // Predicated region
        $region37: #{tpu_custom_call.1} parent=35 // pred_check
          %p480 = pneg %p141
        $region38: #{tpu_custom_call.1} parent=35 // pred_check_branch
          %482 = sbr.rel (%p480) target = $region40
        $region39: #{tpu_custom_call.1} parent=35 // pred_region
          %s484 = ssub.s32 128, 128
          %485 = vsyncadd %s476, %s484
          %s486 = smul.addr %s22, 2
          %s487 = sadd.s32 %s23, %s486
          %s488 = smul.addr %s487, 128
          %s489 = scalar_lea.hbm %s4, %s488
          %s491 = sshll.u32 %s479, 4
          %s492 = int_to_ptr.vmem [resolvable:$true] %s491
          %494 = dma.vmem_to_hbm [thread:$0]  %s492, 128, %s489, %s476
        $region40: #{tpu_custom_call.1} parent=35 // pred_fallthru
          _
      $region36: #{tpu_custom_call.1} parent=5 // pred_fallthru
        _
      %p495 = scmp.le.s32.totalorder 2, %s13
      // Predicated region
      $region41: #{tpu_custom_call.1} parent=5 // pred_check
        %p496 = pneg %p495
      $region42: #{tpu_custom_call.1} parent=5 // pred_check_branch
        %498 = sbr.rel (%p496) target = $region44
      $region43: #{tpu_custom_call.1} parent=5 // pred_region
        %s499 = ssub.s32 %s13, 2
        // Predicated region
        $region45: #{tpu_custom_call.1} parent=43 // pred_check
          %p500 = pneg %p147
        $region46: #{tpu_custom_call.1} parent=43 // pred_check_branch
          %502 = sbr.rel (%p500) target = $region48
        $region47: #{tpu_custom_call.1} parent=43 // pred_region
          %s503 = sand.u32 %s132, 1
          %s504 = scalar_lea.sflag [#allocation3], %s503
          %s505 = sand.u32 %s132, 1
          %s506 = smul.addr %s505, 8
          %s507 = scalar_lea.vmem [#allocation2], %s506
          %508 = dma.done %s504, 128
        $region48: #{tpu_custom_call.1} parent=43 // pred_fallthru
          _
      $region44: #{tpu_custom_call.1} parent=5 // pred_fallthru
        _
    $region6: #{tpu_custom_call.1} parent=1 // loop_footer
      %s17 = sadd.s32 1, %s13
    $region7: #{tpu_custom_call.1} parent=1 // loop_footer_branch
      %12 = sbr.rel target = $region3
    $region8: #{tpu_custom_call.1} parent=1 // loop_exit
      _
    %509 = vsyncpa [#allocation3], 1
    %s510 = scalar_lea.sflag [#allocation3], 1
    %511 = vsyncpa %s510, 1

</llo_original>
